<compile_context>
chip_gen: v7x
topology: tpu7x:2x2x1
jax: 0.10.0
libtpu: 0.0.40
codegen_flags: <defaults>
</compile_context>

<pallas_src>
import functools

import jax
import jax.numpy as jnp
from jax.experimental import pallas as pl
from jax.experimental.pallas import tpu as pltpu

_MAX_RIR_LEN = 3968     # rir = y[:, :, :3968] in the reference
_FILTER_LENGTH = 16384  # hard-coded in the PyTorch module
_LOG_FLOOR = 1e-30      # guards log(0) on silent / zero-padded tails


def _plan(T, tk, max_len):
    """Derive (Tp, tk, n_k, Tpad): lane-aligned, tk-divisible time padding."""
    Tp = min(T, max_len)
    lane_len = pl.cdiv(Tp, 128) * 128
    tk = max(128, min((tk // 128) * 128, lane_len))
    n_k = pl.cdiv(lane_len, tk)
    Tpad = n_k * tk
    return Tp, tk, n_k, Tpad


def build_lag_blocks(filters, T, *, tk=512, max_len=_MAX_RIR_LEN):
    """Per-band block-lag Toeplitz operand, shape (n_bands, n_k, tk, tk), bf16.

    blocks[i, d, s, t] = g_i[d*tk + s - t]   (0 where the lag is negative), with
    g_i[j] = filters[0, 0, L-1-j, i]  (only the last T' taps ever matter).

    Filters are constants during training: call this once and pass the result to
    edc_loss(...) so the operand is not rebuilt (and re-written to HBM) every step.
    """
    L, n_bands = filters.shape[2], filters.shape[3]
    Tp, tk, n_k, Tpad = _plan(T, tk, max_len)
    if L < Tp:
        raise ValueError(
            "Toeplitz-tail shortcut requires filter_length >= truncated RIR length "
            f"(got {L} < {Tp})")
    # Reversed filter tail per band, zero padded to Tpad.
    tail = filters[0, 0, L - Tp:, :][::-1, :].astype(jnp.float32)        # (Tp, n_bands)
    g = jnp.zeros((n_bands, Tpad), jnp.float32).at[:, :Tp].set(tail.T)   # (n_bands, Tpad)
    ss = jnp.arange(tk)[:, None]
    tt = jnp.arange(tk)[None, :]
    lag = jnp.arange(n_k)[:, None, None] * tk + ss - tt                  # (n_k, tk, tk)
    blocks = jnp.where(lag[None] >= 0,
                       g[:, jnp.clip(lag, 0, Tpad - 1)], 0.0)            # (nb, n_k, tk, tk)
    return blocks.astype(jnp.bfloat16)


def _edc_kernel(xy_ref, g_ref, out_ref, conv_ref, *, batch, n_k, tk):
    """Grid = (band, block-lag).  Accumulates the block-Toeplitz conv into conv_ref;
    on the last lag step squares, suffix-sums (MXU), logs and reduces to a per-band
    partial loss written to a lane-dense (1, 8, 128) output tile."""
    d = pl.program_id(1)

    @pl.when(d == 0)
    def _init():
        conv_ref[...] = jnp.zeros_like(conv_ref)

    # One (tk, tk) lag-d Toeplitz block per grid step, reused for every output column.
    g = g_ref[0, 0]                                                   # (tk, tk) bf16

    # conv[:, j] += xy[:, j + d] @ G_d   for every output column tile j with j + d < n_k
    def _acc(j):
        col = pl.multiple_of((j + d) * tk, tk)
        conv_ref[:, j * tk:(j + 1) * tk] += jnp.dot(
            xy_ref[:, pl.ds(col, tk)], g, preferred_element_type=jnp.float32)

    for j in range(n_k):                                              # static unroll
        pl.when(d < n_k - j)(functools.partial(_acc, j))

    @pl.when(d == pl.num_programs(1) - 1)
    def _finalize():
        # Lower-triangular ones operator: (sq @ tri)[t] = sum_{s >= t} sq[s] per chunk.
        r = jax.lax.broadcasted_iota(jnp.int32, (tk, tk), 0)
        c = jax.lax.broadcasted_iota(jnp.int32, (tk, tk), 1)
        tri = (r >= c).astype(jnp.float32)

        carry = jnp.zeros((conv_ref.shape[0], 1), jnp.float32)        # suffix of later chunks
        loss = jnp.zeros((), jnp.float32)
        for n in reversed(range(n_k)):                                # last chunk first
            chunk = conv_ref[:, n * tk:(n + 1) * tk]
            sq = chunk * chunk
            # hi/lo split keeps the MXU suffix sum f32-exact at DEFAULT precision
            # (sq >= 0, so the lo residual error is <= 2^-17 of the suffix sum).
            hi = sq.astype(jnp.bfloat16).astype(jnp.float32)
            lo = sq - hi
            suf = (jnp.dot(hi, tri, preferred_element_type=jnp.float32)
                   + jnp.dot(lo, tri, preferred_element_type=jnp.float32)
                   + carry)
            carry = suf[:, 0:1]                                       # suffix at chunk start
            ec = jnp.log(jnp.maximum(suf, _LOG_FLOOR))
            # Rows [0, batch) hold y, rows [batch, 2*batch) hold y_hat; padded rows and
            # padded time lanes contribute exactly 0 (both sides hit the same floor).
            dd = ec[:batch, :] - ec[batch:2 * batch, :]
            loss = loss + jnp.sum(dd * dd)
        out_ref[...] = jnp.zeros_like(out_ref) + loss


def edc_loss(y_hat, y, filters, *, tk=512, max_len=_MAX_RIR_LEN, lag_blocks=None):
    """y_hat, y: (B, 1, T); filters: (1, 1, filter_length, n_bands).

    tk: time-tile size.  512 is a good default on every generation (double-buffered
        bf16 (tk, tk) lag blocks + resident scratch stay far below v7x's 64 MiB/TC
        VMEM); 1024 further cuts grid steps for long RIRs.
    lag_blocks: optional precomputed output of build_lag_blocks(filters, T, tk=tk)
        (filters are constants, so precompute once per training run).
    """
    B, C, T = y.shape
    assert C == 1 and y_hat.shape == y.shape
    n_bands = filters.shape[3]
    Tp, tk, n_k, Tpad = _plan(T, tk, max_len)
    Mpad = pl.cdiv(2 * B, 8) * 8

    if lag_blocks is None:
        lag_blocks = build_lag_blocks(filters, T, tk=tk, max_len=max_len)
    assert lag_blocks.shape == (n_bands, n_k, tk, tk), (lag_blocks.shape, (n_bands, n_k, tk, tk))

    # Stacked, zero-padded signal slab (bf16): rows [0,B) = y, [B,2B) = y_hat.
    xy = jnp.zeros((Mpad, Tpad), jnp.float32)
    xy = xy.at[:B, :Tp].set(y[:, 0, :Tp].astype(jnp.float32))
    xy = xy.at[B:2 * B, :Tp].set(y_hat[:, 0, :Tp].astype(jnp.float32))
    xy = xy.astype(jnp.bfloat16)

    # VMEM budget: resident xy + double-buffered lag tile + accumulator + epilogue temps.
    vmem_limit = (2 * Mpad * Tpad * 2          # xy (bf16), worst-case double-buffered
                  + 2 * tk * tk * 2            # lag-block tiles (bf16), double-buffered
                  + 2 * 8 * 128 * 4            # per-band output tile
                  + Mpad * Tpad * 4            # conv accumulator scratch
                  + tk * tk * 4                # triangular suffix operator
                  + 8 * Mpad * tk * 4          # finalize temporaries
                  + (16 << 20))                # headroom
    vmem_limit = max(int(vmem_limit), 32 << 20)

    out = pl.pallas_call(
        functools.partial(_edc_kernel, batch=B, n_k=n_k, tk=tk),
        out_shape=jax.ShapeDtypeStruct((n_bands, 8, 128), jnp.float32),
        grid_spec=pltpu.PrefetchScalarGridSpec(
            num_scalar_prefetch=0,
            grid=(n_bands, n_k),                        # (band, block-lag); reduction last
            in_specs=[
                pl.BlockSpec((Mpad, Tpad), lambda i, d: (0, 0)),          # resident slab
                pl.BlockSpec((1, 1, tk, tk), lambda i, d: (i, d, 0, 0)),  # one lag block
            ],
            out_specs=pl.BlockSpec((1, 8, 128), lambda i, d: (i, 0, 0)),
            scratch_shapes=[pltpu.VMEM((Mpad, Tpad), jnp.float32)],
        ),
        compiler_params=pltpu.CompilerParams(
            dimension_semantics=("parallel", "arbitrary"),
            vmem_limit_bytes=vmem_limit,
        ),
    )(xy, lag_blocks)

    n_elem = B * 1 * Tp * n_bands                       # MSE averages over (B, 1, T', n_bands)
    return jnp.sum(out[:, 0, 0]) / n_elem * 10.0


# --- pure-JAX reference mirroring the cupy code (for correctness check) ---
def edc_loss_ref(y_hat, y, filters, filter_length, max_len=_MAX_RIR_LEN):
    def convert(rir):
        rir = rir[:, :, :max_len]
        B, _, T = rir.shape
        nb = filters.shape[3]
        bands = []
        for i in range(nb):
            filt = filters[0, 0, :, i]
            rows = []
            for b in range(B):
                full = jnp.convolve(rir[b, 0], filt)                  # 'full' conv
                sub = full[filter_length - 1:][:T]
                sq = sub * sub
                ec = jnp.log(jnp.cumsum(sq[::-1])[::-1])
                rows.append(ec)
            bands.append(jnp.stack(rows))                             # (B, T)
        return jnp.stack(bands, axis=-1)[:, None, :, :]               # (B, 1, T, nb)

    real = convert(y)
    fake = convert(y_hat)
    return jnp.mean((real - fake) ** 2) * 10.0


if __name__ == "__main__":
    key = jax.random.PRNGKey(0)
    k1, k2, k3 = jax.random.split(key, 3)

    B, T = 2, 256                 # T < 3968, so T' = T
    n_bands = 4
    filter_length = _FILTER_LENGTH

    y = jax.random.normal(k1, (B, 1, T), dtype=jnp.float32)
    y_hat = jax.random.normal(k2, (B, 1, T), dtype=jnp.float32)
    filters = 0.05 * jax.random.normal(
        k3, (1, 1, filter_length, n_bands), dtype=jnp.float32)

    loss = edc_loss(y_hat, y, filters)
    loss = jax.block_until_ready(loss)

    ref = jax.block_until_ready(edc_loss_ref(y_hat, y, filters, filter_length))

    assert bool(jnp.isfinite(loss)), ("non-finite loss", loss)
    rel = abs(float(loss) - float(ref)) / max(abs(float(ref)), 1e-6)
    assert rel < 3e-2, ("mismatch vs reference", float(loss), float(ref), rel)

    print("KERNEL_OK")
</pallas_src>

<mosaic_0001>
module attributes {stable_mosaic.version = 11 : i64} {
  func.func @_edc_kernel(%arg0: i32, %arg1: i32, %arg2: memref<8x256xbf16, #tpu.memory_space<vmem>>, %arg3: memref<1x1x256x256xbf16, #tpu.memory_space<vmem>>, %arg4: memref<1x8x128xf32, #tpu.memory_space<vmem>>, %arg5: memref<8x256xf32, #tpu.memory_space<vmem>>) attributes {dimension_semantics = [#tpu.dimension_semantics<parallel>, #tpu.dimension_semantics<arbitrary>], iteration_bounds = array<i64: 4, 1>, scalar_prefetch = 0 : i64, scratch_operands = 1 : i64, tpu.core_type = #tpu.core_type<tc>, window_params = [{pipeline_mode = #tpu.pipeline_mode<synchronous>, transform_indices = @transform_0, window_bounds = array<i64: 8, 256>}, {transform_indices = @transform_1, window_bounds = array<i64: 1, 1, 256, 256>}, {transform_indices = @transform_2, window_bounds = array<i64: 1, 8, 128>}]} {
    %c0_i32 = arith.constant 0 : i32
    %0 = arith.cmpi eq, %arg1, %c0_i32 : i32
    %1 = arith.extui %0 : i1 to i32
    %c0_i32_0 = arith.constant 0 : i32
    %2 = arith.cmpi ne, %1, %c0_i32_0 : i32
    scf.if %2 {
      %cst = arith.constant 0.000000e+00 : f32
      %11 = vector.broadcast %cst : f32 to vector<8x256xf32>
      %c0_7 = arith.constant 0 : index
      %c0_8 = arith.constant 0 : index
      %12 = vector.load %arg5[%c0_7, %c0_8] : memref<8x256xf32, #tpu.memory_space<vmem>>, vector<8x256xf32>
      tpu.vector_store %arg5[%c0_7, %c0_8], %11 {strides = array<i32>} : memref<8x256xf32, #tpu.memory_space<vmem>>, vector<8x256xf32>,
    } else {
    }
    %c0 = arith.constant 0 : index
    %c0_1 = arith.constant 0 : index
    %c0_2 = arith.constant 0 : index
    %c0_3 = arith.constant 0 : index
    %3 = vector.load %arg3[%c0, %c0_1, %c0_2, %c0_3] : memref<1x1x256x256xbf16, #tpu.memory_space<vmem>>, vector<1x1x256x256xbf16>
    %4 = vector.shape_cast %3 : vector<1x1x256x256xbf16> to vector<256x256xbf16>
    %c1_i32 = arith.constant 1 : i32
    %5 = arith.cmpi slt, %arg1, %c1_i32 : i32
    %6 = arith.extui %5 : i1 to i32
    %c0_i32_4 = arith.constant 0 : i32
    %7 = arith.cmpi ne, %6, %c0_i32_4 : i32
    scf.if %7 {
      %c0_i32_7 = arith.constant 0 : i32
      %11 = arith.addi %c0_i32_7, %arg1 : i32
      %c256_i32 = arith.constant 256 : i32
      %12 = arith.muli %11, %c256_i32 : i32
      %13 = tpu.assume_multiple %12, 256 : i32
      %c0_8 = arith.constant 0 : index
      %c0_9 = arith.constant 0 : index
      %14 = vector.load %arg5[%c0_8, %c0_9] : memref<8x256xf32, #tpu.memory_space<vmem>>, vector<8x256xf32>
      %c0_10 = arith.constant 0 : index
      %15 = arith.index_cast %13 : i32 to index
      %16 = vector.load %arg2[%c0_10, %15] : memref<8x256xbf16, #tpu.memory_space<vmem>>, vector<8x256xbf16>
      %cst = arith.constant dense<0.000000e+00> : vector<8x256xf32>
      %17 = tpu.matmul %16, %4, %cst {dimension_numbers = #tpu.dot_dimension_numbers<[1], [0], [0], [1], [0, 0, 1, 1], [], []>} : vector<8x256xbf16>, vector<256x256xbf16>, vector<8x256xf32> -> vector<8x256xf32>
      %18 = arith.addf %14, %17 : vector<8x256xf32>
      %c0_11 = arith.constant 0 : index
      %c0_12 = arith.constant 0 : index
      %19 = vector.load %arg5[%c0_11, %c0_12] : memref<8x256xf32, #tpu.memory_space<vmem>>, vector<8x256xf32>
      tpu.vector_store %arg5[%c0_11, %c0_12], %18 {strides = array<i32>} : memref<8x256xf32, #tpu.memory_space<vmem>>, vector<8x256xf32>,
    } else {
    }
    %c0_i32_5 = arith.constant 0 : i32
    %8 = arith.cmpi eq, %arg1, %c0_i32_5 : i32
    %9 = arith.extui %8 : i1 to i32
    %c0_i32_6 = arith.constant 0 : i32
    %10 = arith.cmpi ne, %9, %c0_i32_6 : i32
    scf.if %10 {
      %11 = tpu.iota {dimensions = array<i32: 0>} : vector<256x256xi32>
      %12 = tpu.iota {dimensions = array<i32: 1>} : vector<256x256xi32>
      %13 = arith.cmpi sge, %11, %12 : vector<256x256xi32>
      %14 = arith.extui %13 : vector<256x256xi1> to vector<256x256xi32>
      %15 = arith.sitofp %14 : vector<256x256xi32> to vector<256x256xf32>
      %cst = arith.constant 0.000000e+00 : f32
      %16 = vector.broadcast %cst : f32 to vector<8x1xf32>
      %c0_7 = arith.constant 0 : index
      %c0_8 = arith.constant 0 : index
      %17 = vector.load %arg5[%c0_7, %c0_8] : memref<8x256xf32, #tpu.memory_space<vmem>>, vector<8x256xf32>
      %18 = arith.mulf %17, %17 : vector<8x256xf32>
      %19 = arith.truncf %18 : vector<8x256xf32> to vector<8x256xbf16>
      %20 = arith.extf %19 : vector<8x256xbf16> to vector<8x256xf32>
      %21 = arith.subf %18, %20 : vector<8x256xf32>
      %cst_9 = arith.constant dense<0.000000e+00> : vector<8x256xf32>
      %22 = tpu.matmul %20, %15, %cst_9 {dimension_numbers = #tpu.dot_dimension_numbers<[1], [0], [0], [1], [0, 0, 1, 1], [], []>} : vector<8x256xf32>, vector<256x256xf32>, vector<8x256xf32> -> vector<8x256xf32>
      %cst_10 = arith.constant dense<0.000000e+00> : vector<8x256xf32>
      %23 = tpu.matmul %21, %15, %cst_10 {dimension_numbers = #tpu.dot_dimension_numbers<[1], [0], [0], [1], [0, 0, 1, 1], [], []>} : vector<8x256xf32>, vector<256x256xf32>, vector<8x256xf32> -> vector<8x256xf32>
      %24 = arith.addf %22, %23 : vector<8x256xf32>
      %25 = vector.broadcast %16 : vector<8x1xf32> to vector<8x256xf32>
      %26 = arith.addf %24, %25 : vector<8x256xf32>
      %cst_11 = arith.constant 1.000000e-30 : f32
      %27 = vector.broadcast %cst_11 : f32 to vector<8x256xf32>
      %28 = arith.maximumf %26, %27 : vector<8x256xf32>
      %29 = math.log %28 : vector<8x256xf32>
      %30 = vector.extract_strided_slice %29 {offsets = [0, 0], sizes = [2, 256], strides = [1, 1]} : vector<8x256xf32> to vector<2x256xf32>
      %31 = vector.extract_strided_slice %29 {offsets = [2, 0], sizes = [2, 256], strides = [1, 1]} : vector<8x256xf32> to vector<2x256xf32>
      %32 = arith.subf %30, %31 : vector<2x256xf32>
      %33 = arith.mulf %32, %32 : vector<2x256xf32>
      %34 = vector.shape_cast %33 : vector<2x256xf32> to vector<1x2x256xf32>
      %cst_12 = arith.constant dense<0.000000e+00> : vector<1xf32>
      %35 = vector.multi_reduction <add>, %34, %cst_12 [1, 2] : vector<1x2x256xf32> to vector<1xf32>
      %36 = vector.shape_cast %35 : vector<1xf32> to vector<1x1x1xf32>
      %37 = vector.extract %36[0, 0, 0] : f32 from vector<1x1x1xf32>
      %cst_13 = arith.constant 0.000000e+00 : f32
      %38 = arith.addf %cst_13, %37 : f32
      %cst_14 = arith.constant 0.000000e+00 : f32
      %39 = vector.broadcast %cst_14 : f32 to vector<1x8x128xf32>
      %40 = vector.broadcast %38 : f32 to vector<1x8x128xf32>
      %41 = arith.addf %39, %40 : vector<1x8x128xf32>
      %c0_15 = arith.constant 0 : index
      %c0_16 = arith.constant 0 : index
      %c0_17 = arith.constant 0 : index
      %42 = vector.load %arg4[%c0_15, %c0_16, %c0_17] : memref<1x8x128xf32, #tpu.memory_space<vmem>>, vector<1x8x128xf32>
      tpu.vector_store %arg4[%c0_15, %c0_16, %c0_17], %41 {strides = array<i32>} : memref<1x8x128xf32, #tpu.memory_space<vmem>>, vector<1x8x128xf32>,
    } else {
    }
    return
  }
  func.func @transform_0(%arg0: i32, %arg1: i32) -> (i32, i32) {
    %c0_i32 = arith.constant 0 : i32
    %c0_i32_0 = arith.constant 0 : i32
    %c0_i32_1 = arith.constant 0 : i32
    return %c0_i32, %c0_i32_0 : i32, i32
  }
  func.func @transform_1(%arg0: i32, %arg1: i32) -> (i32, i32, i32, i32) {
    %c0_i32 = arith.constant 0 : i32
    %c0_i32_0 = arith.constant 0 : i32
    %c0_i32_1 = arith.constant 0 : i32
    return %arg0, %arg1, %c0_i32, %c0_i32_0 : i32, i32, i32, i32
  }
  func.func @transform_2(%arg0: i32, %arg1: i32) -> (i32, i32, i32) {
    %c0_i32 = arith.constant 0 : i32
    %c0_i32_0 = arith.constant 0 : i32
    %c0_i32_1 = arith.constant 0 : i32
    return %arg0, %c0_i32, %c0_i32_0 : i32, i32, i32
  }
}

</mosaic_0001>

<llo_original>
// kernel: tpu_custom_call.1
$region0: #{tpu_custom_call.1}
  #allocation0 [shape = 'u32[]', space=smem, size = 0x4, offset = 0x4, fixed_abs, tag = 'smem constant byte address 0x4 - core index']
  #allocation1 [shape = 'u32[144,128]{1,0:T(1,128)}', space=vmem, size = 0x12000, scoped, tag = 'internal scratch']
  #allocation2 [shape = 'f32[8,256]{1,0:T(8,128)}', space=vmem, size = 0x2000, scoped, tag = 'scratch operand']
  %s0 = inlined_call_operand.hbm [shape: bf16[8,256], index: 0, kind: input, shape index: {}]
  %s1 = inlined_call_operand.hbm [shape: bf16[4,1,256,256], index: 1, kind: input, shape index: {}]
  %s2 = inlined_call_operand.hbm [shape: f32[4,8,128], index: 2, kind: output, shape index: {}]
  %s3 = sld [smem:[#allocation0]]
  $region61: #{tpu_custom_call.1} parent=0
    _
  %s5 = ssub.s32 1, %s3
  %s6 = scalar_select 0, %s5, %s3
  $region1: #{tpu_custom_call.1} parent=0
    #allocation3 [shape = 'u8[4096]{0}', space=vmem, size = 0x1000, scoped, tag = 'input window, operand 0, single buffered']
    #allocation4 [shape = 's32[2]{0}', space=sflag, size = 0x8, scoped, tag = 'scoped memory for tpu_custom_call.1']
    #allocation5 [shape = 's32[2]{0}', space=sflag, size = 0x8, scoped, tag = 'scoped memory for tpu_custom_call.1']
    #allocation6 [shape = 'u8[262144]{0}', space=vmem, size = 0x40000, scoped, tag = 'input window, operand 1']
    #allocation7 [shape = 's32[2]{0}', space=sflag, size = 0x8, scoped, tag = 'scoped memory for tpu_custom_call.1']
    #allocation8 [shape = 'u8[8192]{0}', space=vmem, size = 0x2000, scoped, tag = 'output window, operand 0']
    %7 = vsyncpa [#allocation4], 0
    %8 = vsyncpa [#allocation7], 0
    %s9 = scalar_lea.sflag [#allocation7], 1
    %10 = vsyncpa %s9, 0
    %11 = vsyncpa [#allocation5], 0
    %s12 = scalar_lea.sflag [#allocation5], 1
    %13 = vsyncpa %s12, 0
    loop: start=0, step=1, limit=6
    $region2: #{tpu_custom_call.1} parent=1 // loop_pre_header
      _
    $region3: #{tpu_custom_call.1} parent=1 // loop_header
      %s15 = sphi 0, %s19
      %p16 = scmp.ge.s32.totalorder %s15, 6
      %s22 = sphi 0, %s34
      %s23 = sphi 0, %s30
      %s24 = sphi 0, %s22
      %s25 = sphi 0, %s23
      %s26 = sphi 0, %s24
      %s27 = sphi 0, %s25
      %s35 = sphi 0, %s35
      %s37 = sphi 0, %s35
      %s38 = sphi 0, %s37
      %s52 = sphi 0, %s38
      %s60 = sphi 0, %s62
      %s63 = sphi 0, %s60
      %s64 = sphi 0, %s63
      %s80 = sphi 0, %s64
      %s86 = sphi 0, %s88
      %s89 = sphi 0, %s86
      %s90 = sphi 0, %s89
      %s106 = sphi 0, %s90
    $region4: #{tpu_custom_call.1} parent=1 // loop_header_branch
      %18 = sbr.rel (%p16) target = $region8
    $region5: #{tpu_custom_call.1} parent=1 // loop_body
      %s20 = ssub.s32 %s15, 1
      %s21 = ssub.s32 %s15, 2
      %s28 = sadd.s32 1, %s23
      %p29 = scmp.ge.s32.totalorder %s28, 1
      %s30 = scalar_select %p29, 0, %s28
      %s31 = sadd.s32 1, %s22
      %s32 = scalar_select %p29, %s31, %s22
      %p33 = scmp.ge.s32.totalorder %s32, 4
      %s34 = scalar_select %p33, 0, %s32
      %s36 = sadd.s32 %s35, 1
      %p39 = scmp.eq.s32.totalorder %s15, 3
      %p40 = scmp.ne.s32.totalorder %s35, %s37
      %p41 = scmp.eq.s32.totalorder %s15, 0
      %p42 = por %p40, %p41
      %p43 = scmp.ne.s32.totalorder %s35, %s37
      %p44 = scmp.eq.s32.totalorder %s20, 3
      %p45 = por %p43, %p44
      %p46 = scmp.ne.s32.totalorder %s37, %s38
      %p47 = scmp.eq.s32.totalorder %s20, 0
      %p48 = por %p46, %p47
      %p49 = scmp.ne.s32.totalorder %s37, %s38
      %p50 = scmp.eq.s32.totalorder %s21, 3
      %p51 = por %p49, %p50
      %p53 = scmp.ne.s32.totalorder %s38, %s52
      %p54 = scmp.eq.s32.totalorder %s21, 0
      %p55 = por %p53, %p54
      %s56 = ssub.s32 %s22, %s34
      %s57 = ssub.s32 %s23, %s30
      %s58 = sor.u32 %s56, %s57
      %p59 = scmp.eq.s32.totalorder %s58, 0
      %s61 = sadd.s32 %s60, 1
      %s62 = scalar_select %p59, %s60, %s61
      %p65 = pneg %p59
      %p66 = scmp.eq.s32.totalorder %s15, 3
      %p67 = por %p65, %p66
      %p68 = scmp.ne.s32.totalorder %s60, %s63
      %p69 = scmp.eq.s32.totalorder %s15, 0
      %p70 = por %p68, %p69
      %p71 = scmp.ne.s32.totalorder %s60, %s63
      %p72 = scmp.eq.s32.totalorder %s20, 3
      %p73 = por %p71, %p72
      %p74 = scmp.ne.s32.totalorder %s63, %s64
      %p75 = scmp.eq.s32.totalorder %s20, 0
      %p76 = por %p74, %p75
      %p77 = scmp.ne.s32.totalorder %s63, %s64
      %p78 = scmp.eq.s32.totalorder %s21, 3
      %p79 = por %p77, %p78
      %p81 = scmp.ne.s32.totalorder %s64, %s80
      %p82 = scmp.eq.s32.totalorder %s21, 0
      %p83 = por %p81, %p82
      %s84 = ssub.s32 %s22, %s34
      %p85 = scmp.eq.s32.totalorder %s84, 0
      %s87 = sadd.s32 %s86, 1
      %s88 = scalar_select %p85, %s86, %s87
      %p91 = pneg %p85
      %p92 = scmp.eq.s32.totalorder %s15, 3
      %p93 = por %p91, %p92
      %p94 = scmp.ne.s32.totalorder %s86, %s89
      %p95 = scmp.eq.s32.totalorder %s15, 0
      %p96 = por %p94, %p95
      %p97 = scmp.ne.s32.totalorder %s86, %s89
      %p98 = scmp.eq.s32.totalorder %s20, 3
      %p99 = por %p97, %p98
      %p100 = scmp.ne.s32.totalorder %s89, %s90
      %p101 = scmp.eq.s32.totalorder %s20, 0
      %p102 = por %p100, %p101
      %p103 = scmp.ne.s32.totalorder %s89, %s90
      %p104 = scmp.eq.s32.totalorder %s21, 3
      %p105 = por %p103, %p104
      %p107 = scmp.ne.s32.totalorder %s90, %s106
      %p108 = scmp.eq.s32.totalorder %s21, 0
      %p109 = por %p107, %p108
      %p110 = scmp.le.s32.totalorder 1, %s15
      %p111 = scmp.lt.s32.totalorder %s15, 5
      %p112 = pnand %p110, %p111
      %p113 = pneg %p112
      // Predicated region
      $region9: #{tpu_custom_call.1} parent=5 // pred_check
        _
      $region10: #{tpu_custom_call.1} parent=5 // pred_check_branch
        %115 = sbr.rel (%p112) target = $region12
      $region11: #{tpu_custom_call.1} parent=5 // pred_region
        %s116 = ssub.s32 %s15, 1
        // Predicated region
        $region13: #{tpu_custom_call.1} parent=11 // pred_check
          %p117 = pneg %p48
        $region14: #{tpu_custom_call.1} parent=11 // pred_check_branch
          %119 = sbr.rel (%p117) target = $region16
        $region15: #{tpu_custom_call.1} parent=11 // pred_region
          %s121 = ssub.s32 128, 128
          %122 = vsyncadd [#allocation4], %s121
          %s124 = sshll.u32 [#allocation3], 4
          %s125 = int_to_ptr.vmem [resolvable:$true] %s124
          %127 = dma.hbm_to_vmem [thread:$0]  %s0, 128, %s125, [#allocation4]
        $region16: #{tpu_custom_call.1} parent=11 // pred_fallthru
          _
      $region12: #{tpu_custom_call.1} parent=5 // pred_fallthru
        _
      %p128 = scmp.lt.s32.totalorder %s15, 4
      // Predicated region
      $region17: #{tpu_custom_call.1} parent=5 // pred_check
        %p129 = pneg %p128
      $region18: #{tpu_custom_call.1} parent=5 // pred_check_branch
        %131 = sbr.rel (%p129) target = $region20
      $region19: #{tpu_custom_call.1} parent=5 // pred_region
        // Predicated region
        $region21: #{tpu_custom_call.1} parent=19 // pred_check
          %p132 = pneg %p70
        $region22: #{tpu_custom_call.1} parent=19 // pred_check_branch
          %134 = sbr.rel (%p132) target = $region24
        $region23: #{tpu_custom_call.1} parent=19 // pred_region
          %s135 = sand.u32 %s60, 1
          %s136 = scalar_lea.sflag [#allocation7], %s135
          %s137 = sand.u32 %s60, 1
          %s138 = smul.addr %s137, 256
          %s139 = scalar_lea.vmem [#allocation6], %s138
          %s141 = ssub.s32 4096, 4096
          %142 = vsyncadd %s136, %s141
          %s143 = smul.addr %s23, 64
          %s144 = smul.addr %s22, 64
          %s145 = sadd.s32 %s143, %s144
          %s146 = smul.addr %s145, 64
          %s147 = scalar_lea.hbm %s1, %s146
          %s148 = sshll.u32 %s139, 4
          %s149 = int_to_ptr.vmem [resolvable:$true] %s148
          %154 = dma.hbm_to_vmem [thread:$0]  %s147, 4096, %s149, %s136, 128, 128, 8
        $region24: #{tpu_custom_call.1} parent=19 // pred_fallthru
          _
      $region20: #{tpu_custom_call.1} parent=5 // pred_fallthru
        _
      %p155 = scmp.le.s32.totalorder 1, %s15
      %p156 = scmp.lt.s32.totalorder %s15, 5
      %p157 = pnand %p155, %p156
      %p158 = pneg %p157
      // Predicated region
      $region25: #{tpu_custom_call.1} parent=5 // pred_check
        _
      $region26: #{tpu_custom_call.1} parent=5 // pred_check_branch
        %160 = sbr.rel (%p157) target = $region28
      $region27: #{tpu_custom_call.1} parent=5 // pred_region
        %s161 = ssub.s32 %s15, 1
        // Predicated region
        $region29: #{tpu_custom_call.1} parent=27 // pred_check
          %p162 = pneg %p48
        $region30: #{tpu_custom_call.1} parent=27 // pred_check_branch
          %164 = sbr.rel (%p162) target = $region32
        $region31: #{tpu_custom_call.1} parent=27 // pred_region
          %165 = dma.done [#allocation4], 128
        $region32: #{tpu_custom_call.1} parent=27 // pred_fallthru
          _
        %s166 = sand.u32 %s63, 1
        %s167 = scalar_lea.sflag [#allocation7], %s166
        %s168 = sand.u32 %s63, 1
        %s169 = smul.addr %s168, 256
        %s170 = scalar_lea.vmem [#allocation6], %s169
        // Predicated region
        $region33: #{tpu_custom_call.1} parent=27 // pred_check
          %p171 = pneg %p76
        $region34: #{tpu_custom_call.1} parent=27 // pred_check_branch
          %173 = sbr.rel (%p171) target = $region36
        $region35: #{tpu_custom_call.1} parent=27 // pred_region
          %174 = dma.done %s167, 4096
        $region36: #{tpu_custom_call.1} parent=27 // pred_fallthru
          _
        %p175 = pneg %p48
        %p176 = pneg %p45
        %s177 = sand.u32 %s63, 1
        %s178 = scalar_lea.sflag [#allocation7], %s177
        %s179 = sand.u32 %s63, 1
        %s180 = smul.addr %s179, 256
        %s181 = scalar_lea.vmem [#allocation6], %s180
        %p182 = pneg %p76
        %p183 = pneg %p73
        %p184 = pneg %p102
        %p185 = pneg %p99
        %s186 = sand.u32 %s89, 1
        %s187 = scalar_lea.sflag [#allocation5], %s186
        %s188 = sand.u32 %s89, 1
        %s189 = smul.addr %s188, 8
        %s190 = scalar_lea.vmem [#allocation8], %s189
        %p191 = scmp.eq.s32.totalorder %s25, 0
        // Predicated region
        $region37: #{tpu_custom_call.1} parent=27 // pred_check
          %p192 = pneg %p191
        $region38: #{tpu_custom_call.1} parent=27 // pred_check_branch
          %194 = sbr.rel (%p192) target = $region40
        $region39: #{tpu_custom_call.1} parent=27 // pred_region
          %195 = vst [vmem:[#allocation2] sm:$0xff] 0.0
          %196 = vst [vmem:[#allocation2 + $0x8] sm:$0xff] 0.0
        $region40: #{tpu_custom_call.1} parent=27 // pred_fallthru
          _
        %v197 = vld [vmem:[%s170] sm:$0xff]
        %v198 = vld [vmem:[%s170 + $0x8] sm:$0xff]
        %v199 = vld [vmem:[%s170 + $0x10] sm:$0xff]
        %v200 = vld [vmem:[%s170 + $0x18] sm:$0xff]
        %v201 = vld [vmem:[%s170 + $0x20] sm:$0xff]
        %v202 = vld [vmem:[%s170 + $0x28] sm:$0xff]
        %v203 = vld [vmem:[%s170 + $0x30] sm:$0xff]
        %v204 = vld [vmem:[%s170 + $0x38] sm:$0xff]
        %v205 = vld [vmem:[%s170 + $0x40] sm:$0xff]
        %v206 = vld [vmem:[%s170 + $0x48] sm:$0xff]
        %v207 = vld [vmem:[%s170 + $0x50] sm:$0xff]
        %v208 = vld [vmem:[%s170 + $0x58] sm:$0xff]
        %v209 = vld [vmem:[%s170 + $0x60] sm:$0xff]
        %v210 = vld [vmem:[%s170 + $0x68] sm:$0xff]
        %v211 = vld [vmem:[%s170 + $0x70] sm:$0xff]
        %v212 = vld [vmem:[%s170 + $0x78] sm:$0xff]
        %v213 = vld [vmem:[%s170 + $0x80] sm:$0xff]
        %v214 = vld [vmem:[%s170 + $0x88] sm:$0xff]
        %v215 = vld [vmem:[%s170 + $0x90] sm:$0xff]
        %v216 = vld [vmem:[%s170 + $0x98] sm:$0xff]
        %v217 = vld [vmem:[%s170 + $0xa0] sm:$0xff]
        %v218 = vld [vmem:[%s170 + $0xa8] sm:$0xff]
        %v219 = vld [vmem:[%s170 + $0xb0] sm:$0xff]
        %v220 = vld [vmem:[%s170 + $0xb8] sm:$0xff]
        %v221 = vld [vmem:[%s170 + $0xc0] sm:$0xff]
        %v222 = vld [vmem:[%s170 + $0xc8] sm:$0xff]
        %v223 = vld [vmem:[%s170 + $0xd0] sm:$0xff]
        %v224 = vld [vmem:[%s170 + $0xd8] sm:$0xff]
        %v225 = vld [vmem:[%s170 + $0xe0] sm:$0xff]
        %v226 = vld [vmem:[%s170 + $0xe8] sm:$0xff]
        %v227 = vld [vmem:[%s170 + $0xf0] sm:$0xff]
        %v228 = vld [vmem:[%s170 + $0xf8] sm:$0xff]
        %p229 = scmp.lt.s32.totalorder %s25, 1
        // Predicated region
        $region41: #{tpu_custom_call.1} parent=27 // pred_check
          %p230 = pneg %p229
        $region42: #{tpu_custom_call.1} parent=27 // pred_check_branch
          %232 = sbr.rel (%p230) target = $region44
        $region43: #{tpu_custom_call.1} parent=27 // pred_region
          %s233 = smul.u32 %s25, 256
          %v234 = vld [vmem:[#allocation2] sm:$0xff]
          %v235 = vld [vmem:[#allocation2 + $0x8] sm:$0xff]
          %s236 = sshra.s32 %s233, 7
          %s237 = sand.u32 %s233, 127
          %s238 = smul.addr %s236, 4
          %s239 = scalar_lea.vmem [#allocation3], %s238
          %v240 = vld [vmem:[%s239] sm:$0xff]
          %v242 = vunpack.c.l.b16 %v240
          %v243 = vunpack.c.h.b16 %v240
          %v244 = vpack.c.b16 %v242, %v242
          %v245 = vpack.c.b16 %v243, %v243
          %v280 = vunpack.c.l.b16 %v197
          %v281 = vunpack.c.h.b16 %v197
          %v282 = vunpack.c.l.b16 %v198
          %v283 = vunpack.c.h.b16 %v198
          %v284 = vunpack.c.l.b16 %v199
          %v285 = vunpack.c.h.b16 %v199
          %v286 = vunpack.c.l.b16 %v200
          %v287 = vunpack.c.h.b16 %v200
          %v288 = vunpack.c.l.b16 %v201
          %v289 = vunpack.c.h.b16 %v201
          %v290 = vunpack.c.l.b16 %v202
          %v291 = vunpack.c.h.b16 %v202
          %v292 = vunpack.c.l.b16 %v203
          %v293 = vunpack.c.h.b16 %v203
          %v294 = vunpack.c.l.b16 %v204
          %v295 = vunpack.c.h.b16 %v204
          %v296 = vunpack.c.l.b16 %v205
          %v297 = vunpack.c.h.b16 %v205
          %v298 = vunpack.c.l.b16 %v206
          %v299 = vunpack.c.h.b16 %v206
          %v300 = vunpack.c.l.b16 %v207
          %v301 = vunpack.c.h.b16 %v207
          %v302 = vunpack.c.l.b16 %v208
          %v303 = vunpack.c.h.b16 %v208
          %v304 = vunpack.c.l.b16 %v209
          %v305 = vunpack.c.h.b16 %v209
          %v306 = vunpack.c.l.b16 %v210
          %v307 = vunpack.c.h.b16 %v210
          %v308 = vunpack.c.l.b16 %v211
          %v309 = vunpack.c.h.b16 %v211
          %v310 = vunpack.c.l.b16 %v212
          %v311 = vunpack.c.h.b16 %v212
          %v312 = vunpack.c.l.b16 %v213
          %v313 = vunpack.c.h.b16 %v213
          %v314 = vunpack.c.l.b16 %v214
          %v315 = vunpack.c.h.b16 %v214
          %v316 = vunpack.c.l.b16 %v215
          %v317 = vunpack.c.h.b16 %v215
          %v318 = vunpack.c.l.b16 %v216
          %v319 = vunpack.c.h.b16 %v216
          %v320 = vunpack.c.l.b16 %v217
          %v321 = vunpack.c.h.b16 %v217
          %v322 = vunpack.c.l.b16 %v218
          %v323 = vunpack.c.h.b16 %v218
          %v324 = vunpack.c.l.b16 %v219
          %v325 = vunpack.c.h.b16 %v219
          %v326 = vunpack.c.l.b16 %v220
          %v327 = vunpack.c.h.b16 %v220
          %v328 = vunpack.c.l.b16 %v221
          %v329 = vunpack.c.h.b16 %v221
          %v330 = vunpack.c.l.b16 %v222
          %v331 = vunpack.c.h.b16 %v222
          %v332 = vunpack.c.l.b16 %v223
          %v333 = vunpack.c.h.b16 %v223
          %v334 = vunpack.c.l.b16 %v224
          %v335 = vunpack.c.h.b16 %v224
          %v336 = vunpack.c.l.b16 %v225
          %v337 = vunpack.c.h.b16 %v225
          %v338 = vunpack.c.l.b16 %v226
          %v339 = vunpack.c.h.b16 %v226
          %v340 = vunpack.c.l.b16 %v227
          %v341 = vunpack.c.h.b16 %v227
          %v342 = vunpack.c.l.b16 %v228
          %v343 = vunpack.c.h.b16 %v228
          %v344 = vpack.c.b16 %v282, %v280
          %v345 = vpack.c.b16 %v283, %v281
          %v346 = vpack.c.b16 %v286, %v284
          %v347 = vpack.c.b16 %v287, %v285
          %v348 = vpack.c.b16 %v290, %v288
          %v349 = vpack.c.b16 %v291, %v289
          %v350 = vpack.c.b16 %v294, %v292
          %v351 = vpack.c.b16 %v295, %v293
          %v352 = vpack.c.b16 %v298, %v296
          %v353 = vpack.c.b16 %v299, %v297
          %v354 = vpack.c.b16 %v302, %v300
          %v355 = vpack.c.b16 %v303, %v301
          %v356 = vpack.c.b16 %v306, %v304
          %v357 = vpack.c.b16 %v307, %v305
          %v358 = vpack.c.b16 %v310, %v308
          %v359 = vpack.c.b16 %v311, %v309
          %v360 = vpack.c.b16 %v314, %v312
          %v361 = vpack.c.b16 %v315, %v313
          %v362 = vpack.c.b16 %v318, %v316
          %v363 = vpack.c.b16 %v319, %v317
          %v364 = vpack.c.b16 %v322, %v320
          %v365 = vpack.c.b16 %v323, %v321
          %v366 = vpack.c.b16 %v326, %v324
          %v367 = vpack.c.b16 %v327, %v325
          %v368 = vpack.c.b16 %v330, %v328
          %v369 = vpack.c.b16 %v331, %v329
          %v370 = vpack.c.b16 %v334, %v332
          %v371 = vpack.c.b16 %v335, %v333
          %v372 = vpack.c.b16 %v338, %v336
          %v373 = vpack.c.b16 %v339, %v337
          %v374 = vpack.c.b16 %v342, %v340
          %v375 = vpack.c.b16 %v343, %v341
          %408 = vmatprep.subr.bf16.mxu0 %v345
          %409 = vmatpush1.bf16.msra.mxu0 %v344
          %410 = vmatprep.subr.bf16.mxu0 %v347
          %411 = vmatpush1.bf16.msra.mxu0 %v346
          %412 = vmatprep.subr.bf16.mxu0 %v349
          %413 = vmatpush1.bf16.msra.mxu0 %v348
          %414 = vmatprep.subr.bf16.mxu0 %v351
          %415 = vmatpush1.bf16.msra.mxu0 %v350
          %416 = vmatprep.subr.bf16.mxu0 %v353
          %417 = vmatpush1.bf16.msra.mxu0 %v352
          %418 = vmatprep.subr.bf16.mxu0 %v355
          %419 = vmatpush1.bf16.msra.mxu0 %v354
          %420 = vmatprep.subr.bf16.mxu0 %v357
          %421 = vmatpush1.bf16.msra.mxu0 %v356
          %422 = vmatprep.subr.bf16.mxu0 %v359
          %423 = vmatpush1.bf16.msra.mxu0 %v358
          %424 = vmatprep.subr.bf16.mxu0 %v361
          %425 = vmatpush1.bf16.msra.mxu0 %v360
          %426 = vmatprep.subr.bf16.mxu0 %v363
          %427 = vmatpush1.bf16.msra.mxu0 %v362
          %428 = vmatprep.subr.bf16.mxu0 %v365
          %429 = vmatpush1.bf16.msra.mxu0 %v364
          %430 = vmatprep.subr.bf16.mxu0 %v367
          %431 = vmatpush1.bf16.msra.mxu0 %v366
          %432 = vmatprep.subr.bf16.mxu0 %v369
          %433 = vmatpush1.bf16.msra.mxu0 %v368
          %434 = vmatprep.subr.bf16.mxu0 %v371
          %435 = vmatpush1.bf16.msra.mxu0 %v370
          %436 = vmatprep.subr.bf16.mxu0 %v373
          %437 = vmatpush1.bf16.msra.mxu0 %v372
          %438 = vmatprep.subr.bf16.mxu0 %v375
          %439 = vmatpush1.bf16.msra.mxu0 %v374
          %440 = vmatprep.mubr.bf16.mxu0 %v245
          %441 = vmatmul.mubr.bf16.gmra.mrb[0].mxu0 %v244
          %v442 = vpop.f32.mrb[0].mxu0
          %v443 = vadd.f32 0.0, %v442
          %v444 = vpop.f32.mrb[0].mxu0
          %v445 = vadd.f32 0.0, %v444
          %v446 = vpop.f32.mrb[0].mxu0
          %v447 = vpop.f32.mrb[0].mxu0
          %448 = vdwg.mxu0
          %v449 = vadd.f32 %v234, %v443
          %v450 = vadd.f32 %v235, %v445
          %451 = vst [vmem:[#allocation2] sm:$0xff] %v449
          %452 = vst [vmem:[#allocation2 + $0x8] sm:$0xff] %v450
        $region44: #{tpu_custom_call.1} parent=27 // pred_fallthru
          _
        // Predicated region
        $region45: #{tpu_custom_call.1} parent=27 // pred_check
          %p453 = pneg %p191
        $region46: #{tpu_custom_call.1} parent=27 // pred_check_branch
          %455 = sbr.rel (%p453) target = $region48
        $region47: #{tpu_custom_call.1} parent=27 // pred_region
          %v456 = vlaneseq
          %v457 = vshrl.u32 %v456, 7
          %v458 = vadd.s32 %v457, 8
          %v459 = vadd.s32 %v457, 16
          %v460 = vadd.s32 %v457, 24
          %v461 = vadd.s32 %v457, 32
          %v462 = vadd.s32 %v457, 40
          %v463 = vadd.s32 %v457, 48
          %v464 = vadd.s32 %v457, 56
          %v465 = vadd.s32 %v457, 64
          %v466 = vadd.s32 %v457, 72
          %v467 = vadd.s32 %v457, 80
          %v468 = vadd.s32 %v457, 88
          %v469 = vadd.s32 %v457, 96
          %v470 = vadd.s32 %v457, 104
          %v471 = vadd.s32 %v457, 112
          %v472 = vadd.s32 %v457, 120
          %v473 = vadd.s32 %v457, 128
          %v474 = vadd.s32 %v457, 136
          %v475 = vadd.s32 %v457, 144
          %v476 = vadd.s32 %v457, 152
          %v477 = vadd.s32 %v457, 160
          %v478 = vadd.s32 %v457, 168
          %v479 = vadd.s32 %v457, 176
          %v480 = vadd.s32 %v457, 184
          %v481 = vadd.s32 %v457, 192
          %v482 = vadd.s32 %v457, 200
          %v483 = vadd.s32 %v457, 208
          %v484 = vadd.s32 %v457, 216
          %v485 = vadd.s32 %v457, 224
          %v486 = vadd.s32 %v457, 232
          %v487 = vadd.s32 %v457, 240
          %v488 = vadd.s32 %v457, 248
          %v489 = vlaneseq
          %v490 = vand.u32 %v489, 127
          %v491 = vadd.s32 %v490, 128
          %vm492 = vcmp.ge.s32.totalorder %v457, %v490
          %vm493 = vcmp.ge.s32.totalorder %v457, %v491
          %vm494 = vcmp.ge.s32.totalorder %v458, %v490
          %vm495 = vcmp.ge.s32.totalorder %v458, %v491
          %vm496 = vcmp.ge.s32.totalorder %v459, %v490
          %vm497 = vcmp.ge.s32.totalorder %v459, %v491
          %vm498 = vcmp.ge.s32.totalorder %v460, %v490
          %vm499 = vcmp.ge.s32.totalorder %v460, %v491
          %vm500 = vcmp.ge.s32.totalorder %v461, %v490
          %vm501 = vcmp.ge.s32.totalorder %v461, %v491
          %vm502 = vcmp.ge.s32.totalorder %v462, %v490
          %vm503 = vcmp.ge.s32.totalorder %v462, %v491
          %vm504 = vcmp.ge.s32.totalorder %v463, %v490
          %vm505 = vcmp.ge.s32.totalorder %v463, %v491
          %vm506 = vcmp.ge.s32.totalorder %v464, %v490
          %vm507 = vcmp.ge.s32.totalorder %v464, %v491
          %vm508 = vcmp.ge.s32.totalorder %v465, %v490
          %vm509 = vcmp.ge.s32.totalorder %v465, %v491
          %vm510 = vcmp.ge.s32.totalorder %v466, %v490
          %vm511 = vcmp.ge.s32.totalorder %v466, %v491
          %vm512 = vcmp.ge.s32.totalorder %v467, %v490
          %vm513 = vcmp.ge.s32.totalorder %v467, %v491
          %vm514 = vcmp.ge.s32.totalorder %v468, %v490
          %vm515 = vcmp.ge.s32.totalorder %v468, %v491
          %vm516 = vcmp.ge.s32.totalorder %v469, %v490
          %vm517 = vcmp.ge.s32.totalorder %v469, %v491
          %vm518 = vcmp.ge.s32.totalorder %v470, %v490
          %vm519 = vcmp.ge.s32.totalorder %v470, %v491
          %vm520 = vcmp.ge.s32.totalorder %v471, %v490
          %vm521 = vcmp.ge.s32.totalorder %v471, %v491
          %vm522 = vcmp.ge.s32.totalorder %v472, %v490
          %vm523 = vcmp.ge.s32.totalorder %v472, %v491
          %vm524 = vcmp.ge.s32.totalorder %v473, %v490
          %vm525 = vcmp.ge.s32.totalorder %v473, %v491
          %vm526 = vcmp.ge.s32.totalorder %v474, %v490
          %vm527 = vcmp.ge.s32.totalorder %v474, %v491
          %vm528 = vcmp.ge.s32.totalorder %v475, %v490
          %vm529 = vcmp.ge.s32.totalorder %v475, %v491
          %vm530 = vcmp.ge.s32.totalorder %v476, %v490
          %vm531 = vcmp.ge.s32.totalorder %v476, %v491
          %vm532 = vcmp.ge.s32.totalorder %v477, %v490
          %vm533 = vcmp.ge.s32.totalorder %v477, %v491
          %vm534 = vcmp.ge.s32.totalorder %v478, %v490
          %vm535 = vcmp.ge.s32.totalorder %v478, %v491
          %vm536 = vcmp.ge.s32.totalorder %v479, %v490
          %vm537 = vcmp.ge.s32.totalorder %v479, %v491
          %vm538 = vcmp.ge.s32.totalorder %v480, %v490
          %vm539 = vcmp.ge.s32.totalorder %v480, %v491
          %vm540 = vcmp.ge.s32.totalorder %v481, %v490
          %vm541 = vcmp.ge.s32.totalorder %v481, %v491
          %vm542 = vcmp.ge.s32.totalorder %v482, %v490
          %vm543 = vcmp.ge.s32.totalorder %v482, %v491
          %vm544 = vcmp.ge.s32.totalorder %v483, %v490
          %vm545 = vcmp.ge.s32.totalorder %v483, %v491
          %vm546 = vcmp.ge.s32.totalorder %v484, %v490
          %vm547 = vcmp.ge.s32.totalorder %v484, %v491
          %vm548 = vcmp.ge.s32.totalorder %v485, %v490
          %vm549 = vcmp.ge.s32.totalorder %v485, %v491
          %vm550 = vcmp.ge.s32.totalorder %v486, %v490
          %vm551 = vcmp.ge.s32.totalorder %v486, %v491
          %vm552 = vcmp.ge.s32.totalorder %v487, %v490
          %vm553 = vcmp.ge.s32.totalorder %v487, %v491
          %vm554 = vcmp.ge.s32.totalorder %v488, %v490
          %vm555 = vcmp.ge.s32.totalorder %v488, %v491
          %v556 = vsel %vm492, 1, 0
          %v557 = vsel %vm493, 1, 0
          %v558 = vsel %vm494, 1, 0
          %v559 = vsel %vm495, 1, 0
          %v560 = vsel %vm496, 1, 0
          %v561 = vsel %vm497, 1, 0
          %v562 = vsel %vm498, 1, 0
          %v563 = vsel %vm499, 1, 0
          %v564 = vsel %vm500, 1, 0
          %v565 = vsel %vm501, 1, 0
          %v566 = vsel %vm502, 1, 0
          %v567 = vsel %vm503, 1, 0
          %v568 = vsel %vm504, 1, 0
          %v569 = vsel %vm505, 1, 0
          %v570 = vsel %vm506, 1, 0
          %v571 = vsel %vm507, 1, 0
          %v572 = vsel %vm508, 1, 0
          %v573 = vsel %vm509, 1, 0
          %v574 = vsel %vm510, 1, 0
          %v575 = vsel %vm511, 1, 0
          %v576 = vsel %vm512, 1, 0
          %v577 = vsel %vm513, 1, 0
          %v578 = vsel %vm514, 1, 0
          %v579 = vsel %vm515, 1, 0
          %v580 = vsel %vm516, 1, 0
          %v581 = vsel %vm517, 1, 0
          %v582 = vsel %vm518, 1, 0
          %v583 = vsel %vm519, 1, 0
          %v584 = vsel %vm520, 1, 0
          %v585 = vsel %vm521, 1, 0
          %v586 = vsel %vm522, 1, 0
          %v587 = vsel %vm523, 1, 0
          %v588 = vsel %vm524, 1, 0
          %v589 = vsel %vm525, 1, 0
          %v590 = vsel %vm526, 1, 0
          %v591 = vsel %vm527, 1, 0
          %v592 = vsel %vm528, 1, 0
          %v593 = vsel %vm529, 1, 0
          %v594 = vsel %vm530, 1, 0
          %v595 = vsel %vm531, 1, 0
          %v596 = vsel %vm532, 1, 0
          %v597 = vsel %vm533, 1, 0
          %v598 = vsel %vm534, 1, 0
          %v599 = vsel %vm535, 1, 0
          %v600 = vsel %vm536, 1, 0
          %v601 = vsel %vm537, 1, 0
          %v602 = vsel %vm538, 1, 0
          %v603 = vsel %vm539, 1, 0
          %v604 = vsel %vm540, 1, 0
          %v605 = vsel %vm541, 1, 0
          %v606 = vsel %vm542, 1, 0
          %v607 = vsel %vm543, 1, 0
          %v608 = vsel %vm544, 1, 0
          %v609 = vsel %vm545, 1, 0
          %v610 = vsel %vm546, 1, 0
          %v611 = vsel %vm547, 1, 0
          %v612 = vsel %vm548, 1, 0
          %v613 = vsel %vm549, 1, 0
          %v614 = vsel %vm550, 1, 0
          %v615 = vsel %vm551, 1, 0
          %v616 = vsel %vm552, 1, 0
          %v617 = vsel %vm553, 1, 0
          %v618 = vsel %vm554, 1, 0
          %v619 = vsel %vm555, 1, 0
          %v620 = vcvt.s32.f32 %v556
          %v621 = vcvt.s32.f32 %v557
          %v622 = vcvt.s32.f32 %v558
          %v623 = vcvt.s32.f32 %v559
          %v624 = vcvt.s32.f32 %v560
          %v625 = vcvt.s32.f32 %v561
          %v626 = vcvt.s32.f32 %v562
          %v627 = vcvt.s32.f32 %v563
          %v628 = vcvt.s32.f32 %v564
          %v629 = vcvt.s32.f32 %v565
          %v630 = vcvt.s32.f32 %v566
          %v631 = vcvt.s32.f32 %v567
          %v632 = vcvt.s32.f32 %v568
          %v633 = vcvt.s32.f32 %v569
          %v634 = vcvt.s32.f32 %v570
          %v635 = vcvt.s32.f32 %v571
          %v636 = vcvt.s32.f32 %v572
          %v637 = vcvt.s32.f32 %v573
          %v638 = vcvt.s32.f32 %v574
          %v639 = vcvt.s32.f32 %v575
          %v640 = vcvt.s32.f32 %v576
          %v641 = vcvt.s32.f32 %v577
          %v642 = vcvt.s32.f32 %v578
          %v643 = vcvt.s32.f32 %v579
          %v644 = vcvt.s32.f32 %v580
          %v645 = vcvt.s32.f32 %v581
          %v646 = vcvt.s32.f32 %v582
          %v647 = vcvt.s32.f32 %v583
          %v648 = vcvt.s32.f32 %v584
          %v649 = vcvt.s32.f32 %v585
          %v650 = vcvt.s32.f32 %v586
          %v651 = vcvt.s32.f32 %v587
          %v652 = vcvt.s32.f32 %v588
          %v653 = vcvt.s32.f32 %v589
          %v654 = vcvt.s32.f32 %v590
          %v655 = vcvt.s32.f32 %v591
          %v656 = vcvt.s32.f32 %v592
          %v657 = vcvt.s32.f32 %v593
          %v658 = vcvt.s32.f32 %v594
          %v659 = vcvt.s32.f32 %v595
          %v660 = vcvt.s32.f32 %v596
          %v661 = vcvt.s32.f32 %v597
          %v662 = vcvt.s32.f32 %v598
          %v663 = vcvt.s32.f32 %v599
          %v664 = vcvt.s32.f32 %v600
          %v665 = vcvt.s32.f32 %v601
          %v666 = vcvt.s32.f32 %v602
          %v667 = vcvt.s32.f32 %v603
          %v668 = vcvt.s32.f32 %v604
          %v669 = vcvt.s32.f32 %v605
          %v670 = vcvt.s32.f32 %v606
          %v671 = vcvt.s32.f32 %v607
          %v672 = vcvt.s32.f32 %v608
          %v673 = vcvt.s32.f32 %v609
          %v674 = vcvt.s32.f32 %v610
          %v675 = vcvt.s32.f32 %v611
          %v676 = vcvt.s32.f32 %v612
          %v677 = vcvt.s32.f32 %v613
          %v678 = vcvt.s32.f32 %v614
          %v679 = vcvt.s32.f32 %v615
          %v680 = vcvt.s32.f32 %v616
          %v681 = vcvt.s32.f32 %v617
          %v682 = vcvt.s32.f32 %v618
          %v683 = vcvt.s32.f32 %v619
          %v684 = vld [vmem:[#allocation2] sm:$0xff]
          %v685 = vld [vmem:[#allocation2 + $0x8] sm:$0xff]
          %v686 = vmul.f32 %v684, %v684
          %v687 = vmul.f32 %v685, %v685
          %v688 = vpack.c.bf16 %v686, %v686
          %v689 = vpack.c.bf16 %v687, %v687
          %v690 = vunpack.c.l.bf16 %v688
          %v691 = vunpack.c.l.bf16 %v689
          %v692 = vsub.f32 %v686, %v690
          %v693 = vsub.f32 %v687, %v691
          %694 = vmatprep.subr.mxu0 %v621
          %695 = vmatpush1.msra.mxu0 %v620
          %696 = vmatprep.subr.mxu0 %v623
          %697 = vmatpush1.msra.mxu0 %v622
          %698 = vmatprep.subr.mxu0 %v625
          %699 = vmatpush1.msra.mxu0 %v624
          %700 = vmatprep.subr.mxu0 %v627
          %701 = vmatpush1.msra.mxu0 %v626
          %702 = vmatprep.subr.mxu0 %v629
          %703 = vmatpush1.msra.mxu0 %v628
          %704 = vmatprep.subr.mxu0 %v631
          %705 = vmatpush1.msra.mxu0 %v630
          %706 = vmatprep.subr.mxu0 %v633
          %707 = vmatpush1.msra.mxu0 %v632
          %708 = vmatprep.subr.mxu0 %v635
          %709 = vmatpush1.msra.mxu0 %v634
          %710 = vmatprep.subr.mxu0 %v637
          %711 = vmatpush1.msra.mxu0 %v636
          %712 = vmatprep.subr.mxu0 %v639
          %713 = vmatpush1.msra.mxu0 %v638
          %714 = vmatprep.subr.mxu0 %v641
          %715 = vmatpush1.msra.mxu0 %v640
          %716 = vmatprep.subr.mxu0 %v643
          %717 = vmatpush1.msra.mxu0 %v642
          %718 = vmatprep.subr.mxu0 %v645
          %719 = vmatpush1.msra.mxu0 %v644
          %720 = vmatprep.subr.mxu0 %v647
          %721 = vmatpush1.msra.mxu0 %v646
          %722 = vmatprep.subr.mxu0 %v649
          %723 = vmatpush1.msra.mxu0 %v648
          %724 = vmatprep.subr.mxu0 %v651
          %725 = vmatpush1.msra.mxu0 %v650
          %726 = vmatprep.subr.mxu0 %v653
          %727 = vmatpush1.msra.mxu0 %v652
          %728 = vmatprep.subr.mxu0 %v655
          %729 = vmatpush1.msra.mxu0 %v654
          %730 = vmatprep.subr.mxu0 %v657
          %731 = vmatpush1.msra.mxu0 %v656
          %732 = vmatprep.subr.mxu0 %v659
          %733 = vmatpush1.msra.mxu0 %v658
          %734 = vmatprep.subr.mxu0 %v661
          %735 = vmatpush1.msra.mxu0 %v660
          %736 = vmatprep.subr.mxu0 %v663
          %737 = vmatpush1.msra.mxu0 %v662
          %738 = vmatprep.subr.mxu0 %v665
          %739 = vmatpush1.msra.mxu0 %v664
          %740 = vmatprep.subr.mxu0 %v667
          %741 = vmatpush1.msra.mxu0 %v666
          %742 = vmatprep.subr.mxu0 %v669
          %743 = vmatpush1.msra.mxu0 %v668
          %744 = vmatprep.subr.mxu0 %v671
          %745 = vmatpush1.msra.mxu0 %v670
          %746 = vmatprep.subr.mxu0 %v673
          %747 = vmatpush1.msra.mxu0 %v672
          %748 = vmatprep.subr.mxu0 %v675
          %749 = vmatpush1.msra.mxu0 %v674
          %750 = vmatprep.subr.mxu0 %v677
          %751 = vmatpush1.msra.mxu0 %v676
          %752 = vmatprep.subr.mxu0 %v679
          %753 = vmatpush1.msra.mxu0 %v678
          %754 = vmatprep.subr.mxu0 %v681
          %755 = vmatpush1.msra.mxu0 %v680
          %756 = vmatprep.subr.mxu0 %v683
          %757 = vmatpush1.msra.mxu0 %v682
          %758 = vmatprep.mubr.f32.mxu0 %v693
          %759 = vmatmul.mubr.f32.gmra.mrb[0].mxu0 %v692
          %v760 = vpop.f32.mrb[0].mxu0
          %v761 = vadd.f32 0.0, %v760
          %v762 = vpop.f32.mrb[0].mxu0
          %v763 = vadd.f32 0.0, %v762
          %764 = vdwg.mxu0
          %765 = vmatprep.subr.mxu0 %v621
          %766 = vmatpush1.msra.mxu0 %v620
          %767 = vmatprep.subr.mxu0 %v623
          %768 = vmatpush1.msra.mxu0 %v622
          %769 = vmatprep.subr.mxu0 %v625
          %770 = vmatpush1.msra.mxu0 %v624
          %771 = vmatprep.subr.mxu0 %v627
          %772 = vmatpush1.msra.mxu0 %v626
          %773 = vmatprep.subr.mxu0 %v629
          %774 = vmatpush1.msra.mxu0 %v628
          %775 = vmatprep.subr.mxu0 %v631
          %776 = vmatpush1.msra.mxu0 %v630
          %777 = vmatprep.subr.mxu0 %v633
          %778 = vmatpush1.msra.mxu0 %v632
          %779 = vmatprep.subr.mxu0 %v635
          %780 = vmatpush1.msra.mxu0 %v634
          %781 = vmatprep.subr.mxu0 %v637
          %782 = vmatpush1.msra.mxu0 %v636
          %783 = vmatprep.subr.mxu0 %v639
          %784 = vmatpush1.msra.mxu0 %v638
          %785 = vmatprep.subr.mxu0 %v641
          %786 = vmatpush1.msra.mxu0 %v640
          %787 = vmatprep.subr.mxu0 %v643
          %788 = vmatpush1.msra.mxu0 %v642
          %789 = vmatprep.subr.mxu0 %v645
          %790 = vmatpush1.msra.mxu0 %v644
          %791 = vmatprep.subr.mxu0 %v647
          %792 = vmatpush1.msra.mxu0 %v646
          %793 = vmatprep.subr.mxu0 %v649
          %794 = vmatpush1.msra.mxu0 %v648
          %795 = vmatprep.subr.mxu0 %v651
          %796 = vmatpush1.msra.mxu0 %v650
          %797 = vmatprep.subr.mxu0 %v653
          %798 = vmatpush1.msra.mxu0 %v652
          %799 = vmatprep.subr.mxu0 %v655
          %800 = vmatpush1.msra.mxu0 %v654
          %801 = vmatprep.subr.mxu0 %v657
          %802 = vmatpush1.msra.mxu0 %v656
          %803 = vmatprep.subr.mxu0 %v659
          %804 = vmatpush1.msra.mxu0 %v658
          %805 = vmatprep.subr.mxu0 %v661
          %806 = vmatpush1.msra.mxu0 %v660
          %807 = vmatprep.subr.mxu0 %v663
          %808 = vmatpush1.msra.mxu0 %v662
          %809 = vmatprep.subr.mxu0 %v665
          %810 = vmatpush1.msra.mxu0 %v664
          %811 = vmatprep.subr.mxu0 %v667
          %812 = vmatpush1.msra.mxu0 %v666
          %813 = vmatprep.subr.mxu0 %v669
          %814 = vmatpush1.msra.mxu0 %v668
          %815 = vmatprep.subr.mxu0 %v671
          %816 = vmatpush1.msra.mxu0 %v670
          %817 = vmatprep.subr.mxu0 %v673
          %818 = vmatpush1.msra.mxu0 %v672
          %819 = vmatprep.subr.mxu0 %v675
          %820 = vmatpush1.msra.mxu0 %v674
          %821 = vmatprep.subr.mxu0 %v677
          %822 = vmatpush1.msra.mxu0 %v676
          %823 = vmatprep.subr.mxu0 %v679
          %824 = vmatpush1.msra.mxu0 %v678
          %825 = vmatprep.subr.mxu0 %v681
          %826 = vmatpush1.msra.mxu0 %v680
          %827 = vmatprep.subr.mxu0 %v683
          %828 = vmatpush1.msra.mxu0 %v682
          %829 = vmatprep.mubr.f32.mxu0 %v691
          %830 = vmatmul.mubr.f32.gmra.mrb[0].mxu0 %v690
          %v831 = vpop.f32.mrb[0].mxu0
          %v832 = vadd.f32 %v761, %v831
          %v833 = vpop.f32.mrb[0].mxu0
          %v834 = vadd.f32 %v763, %v833
          %835 = vdwg.mxu0
          %v836 = vadd.f32 %v832, 0.0
          %v837 = vadd.f32 %v834, 0.0
          %v838 = vmax.f32 %v836, 1e-30
          %v839 = vmax.f32 %v837, 1e-30
          %v840 = vlog2.pop %v838
          %v841 = vmul.f32 %v840, 0.6931472
          %v842 = vlog2.pop %v839
          %v843 = vmul.f32 %v842, 0.6931472
          %v846 = vrot.slane %v841, 2
          %v847 = vrot.slane %v843, 2
          %v850 = vsub.f32 %v841, %v846
          %v851 = vsub.f32 %v843, %v847
          %v852 = vmul.f32 %v850, %v850
          %v853 = vmul.f32 %v851, %v851
          %vm854 = vcmask 1041408
          %v855 = vsel %vm854, %v852, 0.0
          %v856 = vsel %vm854, %v853, 0.0
          %v857 = vadd.f32 %v855, %v856
          %858 = vadd.xlane.f32.xlu0 %v857
          %v859 = vpop.xlane.xlu0 %858
          %v860 = vrot.slane %v859, 4
          %v861 = vadd.f32 %v859, %v860
          %v862 = vrot.slane %v861, 2
          %v863 = vadd.f32 %v861, %v862
          %v864 = vrot.slane %v863, 1
          %v865 = vadd.f32 %v863, %v864
          %s866 = vtos %v865
          %s867 = sadd.f32 %s866, 0.0
          %v868 = vstv %s867
          %v869 = vadd.f32 %v868, 0.0
          %870 = vst [vmem:[%s190] sm:$0xff] %v869
        $region48: #{tpu_custom_call.1} parent=27 // pred_fallthru
          _
        %s871 = sand.u32 %s89, 1
        %s872 = scalar_lea.sflag [#allocation5], %s871
        %s873 = sand.u32 %s89, 1
        %s874 = smul.addr %s873, 8
        %s875 = scalar_lea.vmem [#allocation8], %s874
        // Predicated region
        $region49: #{tpu_custom_call.1} parent=27 // pred_check
          %p876 = pneg %p99
        $region50: #{tpu_custom_call.1} parent=27 // pred_check_branch
          %878 = sbr.rel (%p876) target = $region52
        $region51: #{tpu_custom_call.1} parent=27 // pred_region
          %s880 = ssub.s32 128, 128
          %881 = vsyncadd %s872, %s880
          %s882 = smul.addr %s24, 128
          %s883 = scalar_lea.hbm %s2, %s882
          %s885 = sshll.u32 %s875, 4
          %s886 = int_to_ptr.vmem [resolvable:$true] %s885
          %888 = dma.vmem_to_hbm [thread:$0]  %s886, 128, %s883, %s872
        $region52: #{tpu_custom_call.1} parent=27 // pred_fallthru
          _
      $region28: #{tpu_custom_call.1} parent=5 // pred_fallthru
        _
      %p889 = scmp.le.s32.totalorder 2, %s15
      // Predicated region
      $region53: #{tpu_custom_call.1} parent=5 // pred_check
        %p890 = pneg %p889
      $region54: #{tpu_custom_call.1} parent=5 // pred_check_branch
        %892 = sbr.rel (%p890) target = $region56
      $region55: #{tpu_custom_call.1} parent=5 // pred_region
        %s893 = ssub.s32 %s15, 2
        // Predicated region
        $region57: #{tpu_custom_call.1} parent=55 // pred_check
          %p894 = pneg %p105
        $region58: #{tpu_custom_call.1} parent=55 // pred_check_branch
          %896 = sbr.rel (%p894) target = $region60
        $region59: #{tpu_custom_call.1} parent=55 // pred_region
          %s897 = sand.u32 %s90, 1
          %s898 = scalar_lea.sflag [#allocation5], %s897
          %s899 = sand.u32 %s90, 1
          %s900 = smul.addr %s899, 8
          %s901 = scalar_lea.vmem [#allocation8], %s900
          %902 = dma.done %s898, 128
        $region60: #{tpu_custom_call.1} parent=55 // pred_fallthru
          _
      $region56: #{tpu_custom_call.1} parent=5 // pred_fallthru
        _
    $region6: #{tpu_custom_call.1} parent=1 // loop_footer
      %s19 = sadd.s32 1, %s15
    $region7: #{tpu_custom_call.1} parent=1 // loop_footer_branch
      %14 = sbr.rel target = $region3
    $region8: #{tpu_custom_call.1} parent=1 // loop_exit
      _
    %903 = vsyncpa [#allocation4], 1
    %s904 = scalar_lea.sflag [#allocation4], 1
    %905 = vsyncpa %s904, 1
    %906 = vsyncpa [#allocation7], 1
    %s907 = scalar_lea.sflag [#allocation7], 1
    %908 = vsyncpa %s907, 1
    %909 = vsyncpa [#allocation5], 1
    %s910 = scalar_lea.sflag [#allocation5], 1
    %911 = vsyncpa %s910, 1

</llo_original>
